<compile_context>
chip_gen: v6e
topology: v6e:2x2x1
jax: 0.10.0
libtpu: 0.0.40
codegen_flags: <defaults>
</compile_context>

<pallas_src>
import functools

import jax
import jax.numpy as jnp
import numpy as np
from jax.experimental import pallas as pl
from jax.experimental.pallas import tpu as pltpu

_INV_SQRT2 = 0.7071067811865475
_BN_EPS = 1e-5
_VMEM_LIMIT = 32 * 1024 * 1024  # explicit budget, safe on v5e/v6e (128 MiB) and v7x (64 MiB)


def _pick_spatial_tile(hw, c, max_lanes=512, budget_bytes=4 * 1024 * 1024):
    """Largest multiple-of-128 divisor of H*W (capped) whose double-buffered blocks fit."""
    bytes_per_lane = (9 * c + 3 * c) * 4  # im2col block + y/x/out blocks, f32
    best = None
    tn = 128
    while tn <= min(hw, max_lanes):
        if hw % tn == 0 and 2 * bytes_per_lane * tn <= budget_bytes:
            best = tn
        tn += 128
    return best if best is not None else hw  # fallback: full extent (allowed by BlockSpec)


# ---------- pass 1: 3x3 conv as a single im2col matmul + fused BN sum / sumsq ----------

def _pass1_kernel(p_ref, w1_ref, b1_ref, y_ref, s1_ref, s2_ref):
    # p_ref : (1, 9C, TN) im2col patches     w1_ref: (C, 9C)     b1_ref: (C, 1)
    # y_ref : (1, C, TN)  conv1 output       s1/s2 : (1, C, 1)   per-(b,c) sum / sum-of-squares
    y = jnp.dot(w1_ref[...], p_ref[0], preferred_element_type=jnp.float32) + b1_ref[...]
    y_ref[0] = y  # lane-dense (spatial on lanes) store

    @pl.when(pl.program_id(1) == 0)
    def _init():
        s1_ref[...] = jnp.zeros_like(s1_ref)
        s2_ref[...] = jnp.zeros_like(s2_ref)

    # fused statistics in one pass over y (var = E[y^2] - mean^2 finished in the wrapper)
    s1_ref[...] += jnp.sum(y, axis=1, keepdims=True)[None]
    s2_ref[...] += jnp.sum(y * y, axis=1, keepdims=True)[None]


# ---------- pass 2: folded BN+FiLM affine -> exact GELU -> 1x1 conv (-> + x) ----------

def _make_pass2_kernel(residual):
    def kernel(y_ref, a_ref, c_ref, w2_ref, b2_ref, *rest):
        # y_ref: (1, C, TN)   a_ref/c_ref: (1, C, 1) folded affine   w2_ref: (C, C)   b2_ref: (C, 1)
        o_ref = rest[-1]
        h = y_ref[0] * a_ref[0] + c_ref[0]                      # BN + FiLM folded into one affine
        h = 0.5 * h * (1.0 + jax.lax.erf(h * _INV_SQRT2))       # exact GELU
        z = jnp.dot(w2_ref[...], h, preferred_element_type=jnp.float32) + b2_ref[...]
        if residual:
            z = z + rest[0][0]                                  # residual from x passed directly
        o_ref[0] = z                                            # lane-dense store
    return kernel


@functools.partial(jax.jit, static_argnames=("residual",))
def conv_mlp_withtime(x_nchw, t, params, *, residual=False):
    """x_nchw: (B, C, H, W) f32, t: (B, time_dim) f32 -> (B, C, H, W) f32."""
    B, C, H, W = x_nchw.shape
    HW = H * W
    TN = _pick_spatial_tile(HW, C)
    n_t = HW // TN

    # ---- wrapper-side layout plumbing: NCHW already has spatial contiguous -> lanes ----
    x_flat = x_nchw.reshape(B, C, HW)

    # im2col for the 3x3 / pad=1 conv, built once in the wrapper: (B, 9C, HW)
    xpad = jnp.pad(x_nchw, ((0, 0), (0, 0), (1, 1), (1, 1)))
    patches = jnp.concatenate(
        [xpad[:, :, dy:dy + H, dx:dx + W] for dy in range(3) for dx in range(3)],
        axis=1).reshape(B, 9 * C, HW)
    # conv1 weight (HWIO) -> (C_out, 9*C_in), matching the (dy, dx, ci) patch order
    w1m = jnp.transpose(params["w1"], (3, 0, 1, 2)).reshape(C, 9 * C)
    b1c = params["b1"].reshape(C, 1)

    # ---- time MLP hoisted out of the gridded kernels (independent of H, W) ----
    ts = t * jax.nn.sigmoid(t)                   # SiLU
    te = ts @ params["wt"] + params["bt"]        # (B, 2C)
    scale, shift = te[:, :C], te[:, C:]

    cparams1 = pltpu.CompilerParams(
        dimension_semantics=("parallel", "arbitrary"),  # stats accumulate along the last axis
        vmem_limit_bytes=_VMEM_LIMIT)
    cparams2 = pltpu.CompilerParams(
        dimension_semantics=("parallel", "parallel"),
        vmem_limit_bytes=_VMEM_LIMIT)

    # ---- pass 1: conv1 (single im2col matmul) + fused per-channel sum / sumsq ----
    y, s1, s2 = pl.pallas_call(
        _pass1_kernel,
        grid=(B, n_t),
        in_specs=[
            pl.BlockSpec((1, 9 * C, TN), lambda b, j: (b, 0, j)),
            pl.BlockSpec((C, 9 * C), lambda b, j: (0, 0)),
            pl.BlockSpec((C, 1), lambda b, j: (0, 0)),
        ],
        out_specs=[
            pl.BlockSpec((1, C, TN), lambda b, j: (b, 0, j)),
            pl.BlockSpec((1, C, 1), lambda b, j: (b, 0, 0)),
            pl.BlockSpec((1, C, 1), lambda b, j: (b, 0, 0)),
        ],
        out_shape=(
            jax.ShapeDtypeStruct((B, C, HW), jnp.float32),
            jax.ShapeDtypeStruct((B, C, 1), jnp.float32),
            jax.ShapeDtypeStruct((B, C, 1), jnp.float32),
        ),
        compiler_params=cparams1,
    )(patches, w1m, b1c)

    # ---- tiny O(B*C) glue: finish global BN stats, fold BN with the FiLM affine ----
    n = B * HW
    mean = jnp.sum(s1[:, :, 0], axis=0) / n                       # (C,)
    var = jnp.sum(s2[:, :, 0], axis=0) / n - mean * mean
    inv = jax.lax.rsqrt(var + _BN_EPS)
    a_bn = params["gamma"].reshape(C) * inv
    b_bn = params["beta"].reshape(C) - mean * a_bn
    a_f = a_bn[None, :] * (scale + 1.0)                           # (B, C)
    c_f = b_bn[None, :] * (scale + 1.0) + shift                   # (B, C)
    a3, c3 = a_f[:, :, None], c_f[:, :, None]                     # (B, C, 1)

    w2m = params["w2"].T                                          # (C_out, C_in)
    b2c = params["b2"].reshape(C, 1)

    # ---- pass 2: normalize+FiLM (folded), GELU, 1x1 conv, optional residual ----
    ops = [y, a3, c3, w2m, b2c]
    in_specs = [
        pl.BlockSpec((1, C, TN), lambda b, j: (b, 0, j)),
        pl.BlockSpec((1, C, 1), lambda b, j: (b, 0, 0)),
        pl.BlockSpec((1, C, 1), lambda b, j: (b, 0, 0)),
        pl.BlockSpec((C, C), lambda b, j: (0, 0)),
        pl.BlockSpec((C, 1), lambda b, j: (0, 0)),
    ]
    if residual:
        ops.append(x_flat)
        in_specs.append(pl.BlockSpec((1, C, TN), lambda b, j: (b, 0, j)))

    out_flat = pl.pallas_call(
        _make_pass2_kernel(residual),
        grid=(B, n_t),
        in_specs=in_specs,
        out_specs=pl.BlockSpec((1, C, TN), lambda b, j: (b, 0, j)),
        out_shape=jax.ShapeDtypeStruct((B, C, HW), jnp.float32),
        compiler_params=cparams2,
    )(*ops)

    return out_flat.reshape(B, C, H, W)


def _reference(x_nchw, t, params, residual=False):
    """Pure-JAX reference with identical math for the correctness check."""
    x = jnp.transpose(x_nchw, (0, 2, 3, 1))
    C = x.shape[-1]
    y = jax.lax.conv_general_dilated(
        x, params["w1"], (1, 1), "SAME",
        dimension_numbers=("NHWC", "HWIO", "NHWC")) + params["b1"]
    mean = jnp.mean(y, axis=(0, 1, 2), keepdims=True)
    var = jnp.mean((y - mean) ** 2, axis=(0, 1, 2), keepdims=True)
    y = (y - mean) / jnp.sqrt(var + _BN_EPS) * params["gamma"] + params["beta"]
    ts = t * jax.nn.sigmoid(t)
    te = ts @ params["wt"] + params["bt"]
    scale = te[:, :C][:, None, None, :]
    shift = te[:, C:][:, None, None, :]
    y = y * (scale + 1.0) + shift
    y = 0.5 * y * (1.0 + jax.lax.erf(y * _INV_SQRT2))
    z = jnp.einsum("bhwc,cd->bhwd", y, params["w2"]) + params["b2"]
    if residual:
        z = z + x
    return jnp.transpose(z, (0, 3, 1, 2))


def _init_params(key, embed_dim, time_dim):
    ks = jax.random.split(key, 6)
    C = embed_dim
    return {
        # conv_1: Conv2d(C, C, 3, padding=1) -> weights stored HWIO
        "w1": 0.1 * jax.random.normal(ks[0], (3, 3, C, C), jnp.float32),
        "b1": 0.1 * jax.random.normal(ks[1], (1, C), jnp.float32),
        # BatchNorm2d affine params (PyTorch default init: weight=1, bias=0)
        "gamma": jnp.ones((1, C), jnp.float32),
        "beta": jnp.zeros((1, C), jnp.float32),
        # time_mlp Linear(time_dim, 2C)
        "wt": 0.1 * jax.random.normal(ks[2], (time_dim, 2 * C), jnp.float32),
        "bt": 0.1 * jax.random.normal(ks[3], (1, 2 * C), jnp.float32),
        # conv_2: Conv2d(C, C, 1) -> (Cin, Cout) matrix
        "w2": 0.1 * jax.random.normal(ks[4], (C, C), jnp.float32),
        "b2": 0.1 * jax.random.normal(ks[5], (1, C), jnp.float32),
    }


if __name__ == "__main__":
    B, C, time_dim = 2, 4, 32
    key = jax.random.PRNGKey(0)
    kx, kt, kp = jax.random.split(key, 3)
    params = _init_params(kp, C, time_dim)
    t = jax.random.normal(kt, (B, time_dim), jnp.float32)

    # (H, W, residual): spec's Conv_MLP_withtime (no residual), the previously reviewed
    # `_res` variant, and a larger spatial size that exercises the multi-tile grid path.
    cases = [(16, 16, False), (16, 16, True), (32, 32, False)]
    for idx, (H, W, residual) in enumerate(cases):
        x = jax.random.normal(jax.random.fold_in(kx, idx), (B, C, H, W), jnp.float32)
        out = jax.block_until_ready(conv_mlp_withtime(x, t, params, residual=residual))
        ref = jax.block_until_ready(_reference(x, t, params, residual=residual))
        assert out.shape == (B, C, H, W)
        np.testing.assert_allclose(np.asarray(out), np.asarray(ref), rtol=1e-4, atol=1e-4)

    print("KERNEL_OK")
</pallas_src>

<mosaic_0001>
module attributes {stable_mosaic.version = 11 : i64} {
  func.func @_pass1_kernel(%arg0: i32, %arg1: i32, %arg2: memref<1x36x256xf32, #tpu.memory_space<vmem>>, %arg3: memref<4x36xf32, #tpu.memory_space<vmem>>, %arg4: memref<4x1xf32, #tpu.memory_space<vmem>>, %arg5: memref<1x4x256xf32, #tpu.memory_space<vmem>>, %arg6: memref<1x4x1xf32, #tpu.memory_space<vmem>>, %arg7: memref<1x4x1xf32, #tpu.memory_space<vmem>>) attributes {dimension_semantics = [#tpu.dimension_semantics<parallel>, #tpu.dimension_semantics<arbitrary>], iteration_bounds = array<i64: 2, 1>, scalar_prefetch = 0 : i64, scratch_operands = 0 : i64, tpu.core_type = #tpu.core_type<tc>, window_params = [{transform_indices = @transform_0, window_bounds = array<i64: 1, 36, 256>}, {pipeline_mode = #tpu.pipeline_mode<synchronous>, transform_indices = @transform_1, window_bounds = array<i64: 4, 36>}, {pipeline_mode = #tpu.pipeline_mode<synchronous>, transform_indices = @transform_2, window_bounds = array<i64: 4, 1>}, {transform_indices = @transform_3, window_bounds = array<i64: 1, 4, 256>}, {transform_indices = @transform_4, window_bounds = array<i64: 1, 4, 1>}, {transform_indices = @transform_5, window_bounds = array<i64: 1, 4, 1>}]} {
    %c0 = arith.constant 0 : index
    %c0_0 = arith.constant 0 : index
    %0 = vector.load %arg3[%c0, %c0_0] : memref<4x36xf32, #tpu.memory_space<vmem>>, vector<4x36xf32>
    %c0_1 = arith.constant 0 : index
    %c0_2 = arith.constant 0 : index
    %c0_3 = arith.constant 0 : index
    %1 = vector.load %arg2[%c0_1, %c0_2, %c0_3] : memref<1x36x256xf32, #tpu.memory_space<vmem>>, vector<1x36x256xf32>
    %2 = vector.shape_cast %1 : vector<1x36x256xf32> to vector<36x256xf32>
    %cst = arith.constant dense<0.000000e+00> : vector<4x256xf32>
    %3 = tpu.matmul %0, %2, %cst {dimension_numbers = #tpu.dot_dimension_numbers<[1], [0], [0], [1], [0, 0, 1, 1], [], []>} : vector<4x36xf32>, vector<36x256xf32>, vector<4x256xf32> -> vector<4x256xf32>
    %c0_4 = arith.constant 0 : index
    %c0_5 = arith.constant 0 : index
    %4 = vector.load %arg4[%c0_4, %c0_5] : memref<4x1xf32, #tpu.memory_space<vmem>>, vector<4x1xf32>
    %5 = vector.broadcast %4 : vector<4x1xf32> to vector<4x256xf32>
    %6 = arith.addf %3, %5 : vector<4x256xf32>
    %c0_6 = arith.constant 0 : index
    %c0_7 = arith.constant 0 : index
    %c0_8 = arith.constant 0 : index
    %7 = vector.load %arg5[%c0_6, %c0_7, %c0_8] : memref<1x4x256xf32, #tpu.memory_space<vmem>>, vector<1x4x256xf32>
    %8 = vector.shape_cast %7 : vector<1x4x256xf32> to vector<4x256xf32>
    %9 = vector.shape_cast %6 : vector<4x256xf32> to vector<1x4x256xf32>
    tpu.vector_store %arg5[%c0_6, %c0_7, %c0_8], %9 {strides = array<i32>} : memref<1x4x256xf32, #tpu.memory_space<vmem>>, vector<1x4x256xf32>,
    %c0_i32 = arith.constant 0 : i32
    %10 = arith.cmpi eq, %arg1, %c0_i32 : i32
    %11 = arith.extui %10 : i1 to i32
    %c0_i32_9 = arith.constant 0 : i32
    %12 = arith.cmpi ne, %11, %c0_i32_9 : i32
    scf.if %12 {
      %cst_24 = arith.constant 0.000000e+00 : f32
      %26 = vector.broadcast %cst_24 : f32 to vector<1x4x1xf32>
      %c0_25 = arith.constant 0 : index
      %c0_26 = arith.constant 0 : index
      %c0_27 = arith.constant 0 : index
      %27 = vector.load %arg6[%c0_25, %c0_26, %c0_27] : memref<1x4x1xf32, #tpu.memory_space<vmem>>, vector<1x4x1xf32>
      tpu.vector_store %arg6[%c0_25, %c0_26, %c0_27], %26 {strides = array<i32>} : memref<1x4x1xf32, #tpu.memory_space<vmem>>, vector<1x4x1xf32>,
      %cst_28 = arith.constant 0.000000e+00 : f32
      %28 = vector.broadcast %cst_28 : f32 to vector<1x4x1xf32>
      %c0_29 = arith.constant 0 : index
      %c0_30 = arith.constant 0 : index
      %c0_31 = arith.constant 0 : index
      %29 = vector.load %arg7[%c0_29, %c0_30, %c0_31] : memref<1x4x1xf32, #tpu.memory_space<vmem>>, vector<1x4x1xf32>
      tpu.vector_store %arg7[%c0_29, %c0_30, %c0_31], %28 {strides = array<i32>} : memref<1x4x1xf32, #tpu.memory_space<vmem>>, vector<1x4x1xf32>,
    } else {
    }
    %c0_10 = arith.constant 0 : index
    %c0_11 = arith.constant 0 : index
    %c0_12 = arith.constant 0 : index
    %13 = vector.load %arg6[%c0_10, %c0_11, %c0_12] : memref<1x4x1xf32, #tpu.memory_space<vmem>>, vector<1x4x1xf32>
    %cst_13 = arith.constant dense<0.000000e+00> : vector<4xf32>
    %14 = vector.multi_reduction <add>, %6, %cst_13 [1] : vector<4x256xf32> to vector<4xf32>
    %15 = vector.shape_cast %14 : vector<4xf32> to vector<4x1xf32>
    %16 = vector.shape_cast %15 : vector<4x1xf32> to vector<1x4x1xf32>
    %17 = arith.addf %13, %16 : vector<1x4x1xf32>
    %c0_14 = arith.constant 0 : index
    %c0_15 = arith.constant 0 : index
    %c0_16 = arith.constant 0 : index
    %18 = vector.load %arg6[%c0_14, %c0_15, %c0_16] : memref<1x4x1xf32, #tpu.memory_space<vmem>>, vector<1x4x1xf32>
    tpu.vector_store %arg6[%c0_14, %c0_15, %c0_16], %17 {strides = array<i32>} : memref<1x4x1xf32, #tpu.memory_space<vmem>>, vector<1x4x1xf32>,
    %c0_17 = arith.constant 0 : index
    %c0_18 = arith.constant 0 : index
    %c0_19 = arith.constant 0 : index
    %19 = vector.load %arg7[%c0_17, %c0_18, %c0_19] : memref<1x4x1xf32, #tpu.memory_space<vmem>>, vector<1x4x1xf32>
    %20 = arith.mulf %6, %6 : vector<4x256xf32>
    %cst_20 = arith.constant dense<0.000000e+00> : vector<4xf32>
    %21 = vector.multi_reduction <add>, %20, %cst_20 [1] : vector<4x256xf32> to vector<4xf32>
    %22 = vector.shape_cast %21 : vector<4xf32> to vector<4x1xf32>
    %23 = vector.shape_cast %22 : vector<4x1xf32> to vector<1x4x1xf32>
    %24 = arith.addf %19, %23 : vector<1x4x1xf32>
    %c0_21 = arith.constant 0 : index
    %c0_22 = arith.constant 0 : index
    %c0_23 = arith.constant 0 : index
    %25 = vector.load %arg7[%c0_21, %c0_22, %c0_23] : memref<1x4x1xf32, #tpu.memory_space<vmem>>, vector<1x4x1xf32>
    tpu.vector_store %arg7[%c0_21, %c0_22, %c0_23], %24 {strides = array<i32>} : memref<1x4x1xf32, #tpu.memory_space<vmem>>, vector<1x4x1xf32>,
    return
  }
  func.func @transform_0(%arg0: i32, %arg1: i32) -> (i32, i32, i32) {
    %c0_i32 = arith.constant 0 : i32
    %c0_i32_0 = arith.constant 0 : i32
    return %arg0, %c0_i32, %arg1 : i32, i32, i32
  }
  func.func @transform_1(%arg0: i32, %arg1: i32) -> (i32, i32) {
    %c0_i32 = arith.constant 0 : i32
    %c0_i32_0 = arith.constant 0 : i32
    %c0_i32_1 = arith.constant 0 : i32
    return %c0_i32, %c0_i32_0 : i32, i32
  }
  func.func @transform_2(%arg0: i32, %arg1: i32) -> (i32, i32) {
    %c0_i32 = arith.constant 0 : i32
    %c0_i32_0 = arith.constant 0 : i32
    %c0_i32_1 = arith.constant 0 : i32
    return %c0_i32, %c0_i32_0 : i32, i32
  }
  func.func @transform_3(%arg0: i32, %arg1: i32) -> (i32, i32, i32) {
    %c0_i32 = arith.constant 0 : i32
    %c0_i32_0 = arith.constant 0 : i32
    return %arg0, %c0_i32, %arg1 : i32, i32, i32
  }
  func.func @transform_4(%arg0: i32, %arg1: i32) -> (i32, i32, i32) {
    %c0_i32 = arith.constant 0 : i32
    %c0_i32_0 = arith.constant 0 : i32
    %c0_i32_1 = arith.constant 0 : i32
    return %arg0, %c0_i32, %c0_i32_0 : i32, i32, i32
  }
  func.func @transform_5(%arg0: i32, %arg1: i32) -> (i32, i32, i32) {
    %c0_i32 = arith.constant 0 : i32
    %c0_i32_0 = arith.constant 0 : i32
    %c0_i32_1 = arith.constant 0 : i32
    return %arg0, %c0_i32, %c0_i32_0 : i32, i32, i32
  }
}

module attributes {stable_mosaic.version = 11 : i64} {
  func.func @kernel(%arg0: i32, %arg1: i32, %arg2: memref<1x4x256xf32, #tpu.memory_space<vmem>>, %arg3: memref<1x4x1xf32, #tpu.memory_space<vmem>>, %arg4: memref<1x4x1xf32, #tpu.memory_space<vmem>>, %arg5: memref<4x4xf32, #tpu.memory_space<vmem>>, %arg6: memref<4x1xf32, #tpu.memory_space<vmem>>, %arg7: memref<1x4x256xf32, #tpu.memory_space<vmem>>) attributes {dimension_semantics = [#tpu.dimension_semantics<parallel>, #tpu.dimension_semantics<parallel>], iteration_bounds = array<i64: 2, 1>, scalar_prefetch = 0 : i64, scratch_operands = 0 : i64, tpu.core_type = #tpu.core_type<tc>, window_params = [{transform_indices = @transform_0, window_bounds = array<i64: 1, 4, 256>}, {transform_indices = @transform_1, window_bounds = array<i64: 1, 4, 1>}, {transform_indices = @transform_2, window_bounds = array<i64: 1, 4, 1>}, {pipeline_mode = #tpu.pipeline_mode<synchronous>, transform_indices = @transform_3, window_bounds = array<i64: 4, 4>}, {pipeline_mode = #tpu.pipeline_mode<synchronous>, transform_indices = @transform_4, window_bounds = array<i64: 4, 1>}, {transform_indices = @transform_5, window_bounds = array<i64: 1, 4, 256>}]} {
    %c0 = arith.constant 0 : index
    %c0_0 = arith.constant 0 : index
    %c0_1 = arith.constant 0 : index
    %0 = vector.load %arg2[%c0, %c0_0, %c0_1] : memref<1x4x256xf32, #tpu.memory_space<vmem>>, vector<1x4x256xf32>
    %1 = vector.shape_cast %0 : vector<1x4x256xf32> to vector<4x256xf32>
    %c0_2 = arith.constant 0 : index
    %c0_3 = arith.constant 0 : index
    %c0_4 = arith.constant 0 : index
    %2 = vector.load %arg3[%c0_2, %c0_3, %c0_4] : memref<1x4x1xf32, #tpu.memory_space<vmem>>, vector<1x4x1xf32>
    %3 = vector.shape_cast %2 : vector<1x4x1xf32> to vector<4x1xf32>
    %4 = vector.broadcast %3 : vector<4x1xf32> to vector<4x256xf32>
    %5 = arith.mulf %1, %4 : vector<4x256xf32>
    %c0_5 = arith.constant 0 : index
    %c0_6 = arith.constant 0 : index
    %c0_7 = arith.constant 0 : index
    %6 = vector.load %arg4[%c0_5, %c0_6, %c0_7] : memref<1x4x1xf32, #tpu.memory_space<vmem>>, vector<1x4x1xf32>
    %7 = vector.shape_cast %6 : vector<1x4x1xf32> to vector<4x1xf32>
    %8 = vector.broadcast %7 : vector<4x1xf32> to vector<4x256xf32>
    %9 = arith.addf %5, %8 : vector<4x256xf32>
    %cst = arith.constant 5.000000e-01 : f32
    %10 = vector.broadcast %cst : f32 to vector<4x256xf32>
    %11 = arith.mulf %10, %9 : vector<4x256xf32>
    %cst_8 = arith.constant 0.707106769 : f32
    %12 = vector.broadcast %cst_8 : f32 to vector<4x256xf32>
    %13 = arith.mulf %9, %12 : vector<4x256xf32>
    %14 = math.erf %13 : vector<4x256xf32>
    %cst_9 = arith.constant 1.000000e+00 : f32
    %15 = vector.broadcast %cst_9 : f32 to vector<4x256xf32>
    %16 = arith.addf %15, %14 : vector<4x256xf32>
    %17 = arith.mulf %11, %16 : vector<4x256xf32>
    %c0_10 = arith.constant 0 : index
    %c0_11 = arith.constant 0 : index
    %18 = vector.load %arg5[%c0_10, %c0_11] : memref<4x4xf32, #tpu.memory_space<vmem>>, vector<4x4xf32>
    %cst_12 = arith.constant dense<0.000000e+00> : vector<4x256xf32>
    %19 = tpu.matmul %18, %17, %cst_12 {dimension_numbers = #tpu.dot_dimension_numbers<[1], [0], [0], [1], [0, 0, 1, 1], [], []>} : vector<4x4xf32>, vector<4x256xf32>, vector<4x256xf32> -> vector<4x256xf32>
    %c0_13 = arith.constant 0 : index
    %c0_14 = arith.constant 0 : index
    %20 = vector.load %arg6[%c0_13, %c0_14] : memref<4x1xf32, #tpu.memory_space<vmem>>, vector<4x1xf32>
    %21 = vector.broadcast %20 : vector<4x1xf32> to vector<4x256xf32>
    %22 = arith.addf %19, %21 : vector<4x256xf32>
    %c0_15 = arith.constant 0 : index
    %c0_16 = arith.constant 0 : index
    %c0_17 = arith.constant 0 : index
    %23 = vector.load %arg7[%c0_15, %c0_16, %c0_17] : memref<1x4x256xf32, #tpu.memory_space<vmem>>, vector<1x4x256xf32>
    %24 = vector.shape_cast %23 : vector<1x4x256xf32> to vector<4x256xf32>
    %25 = vector.shape_cast %22 : vector<4x256xf32> to vector<1x4x256xf32>
    tpu.vector_store %arg7[%c0_15, %c0_16, %c0_17], %25 {strides = array<i32>} : memref<1x4x256xf32, #tpu.memory_space<vmem>>, vector<1x4x256xf32>,
    return
  }
  func.func @transform_0(%arg0: i32, %arg1: i32) -> (i32, i32, i32) {
    %c0_i32 = arith.constant 0 : i32
    %c0_i32_0 = arith.constant 0 : i32
    return %arg0, %c0_i32, %arg1 : i32, i32, i32
  }
  func.func @transform_1(%arg0: i32, %arg1: i32) -> (i32, i32, i32) {
    %c0_i32 = arith.constant 0 : i32
    %c0_i32_0 = arith.constant 0 : i32
    %c0_i32_1 = arith.constant 0 : i32
    return %arg0, %c0_i32, %c0_i32_0 : i32, i32, i32
  }
  func.func @transform_2(%arg0: i32, %arg1: i32) -> (i32, i32, i32) {
    %c0_i32 = arith.constant 0 : i32
    %c0_i32_0 = arith.constant 0 : i32
    %c0_i32_1 = arith.constant 0 : i32
    return %arg0, %c0_i32, %c0_i32_0 : i32, i32, i32
  }
  func.func @transform_3(%arg0: i32, %arg1: i32) -> (i32, i32) {
    %c0_i32 = arith.constant 0 : i32
    %c0_i32_0 = arith.constant 0 : i32
    %c0_i32_1 = arith.constant 0 : i32
    return %c0_i32, %c0_i32_0 : i32, i32
  }
  func.func @transform_4(%arg0: i32, %arg1: i32) -> (i32, i32) {
    %c0_i32 = arith.constant 0 : i32
    %c0_i32_0 = arith.constant 0 : i32
    %c0_i32_1 = arith.constant 0 : i32
    return %c0_i32, %c0_i32_0 : i32, i32
  }
  func.func @transform_5(%arg0: i32, %arg1: i32) -> (i32, i32, i32) {
    %c0_i32 = arith.constant 0 : i32
    %c0_i32_0 = arith.constant 0 : i32
    return %arg0, %c0_i32, %arg1 : i32, i32, i32
  }
}

</mosaic_0001>

<llo_original>
// kernel: conv_mlp_withtime.2
$region0: #{conv_mlp_withtime.2}
  #allocation0 [shape = 'u32[]', space=smem, size = 0x4, offset = 0x4, fixed_abs, tag = 'smem constant byte address 0x4 - core index']
  #allocation1 [shape = 'u32[144,128]{1,0:T(1,128)}', space=vmem, size = 0x12000, scoped, tag = 'internal scratch']
  %s0 = inlined_call_operand.vmem [shape: f32[2,36,256], index: 0, kind: input, shape index: {}]
  %s1 = inlined_call_operand.vmem [shape: f32[4,36], index: 1, kind: input, shape index: {}]
  %s2 = inlined_call_operand.vmem [shape: f32[4,1], index: 2, kind: input, shape index: {}]
  %s3 = inlined_call_operand.vmem [shape: f32[2,4,256], index: 3, kind: output, shape index: {0}]
  %s4 = inlined_call_operand.vmem [shape: f32[2,4,1], index: 4, kind: output, shape index: {1}]
  %s5 = inlined_call_operand.vmem [shape: f32[2,4,1], index: 5, kind: output, shape index: {2}]
  %6 = xla_tuple %s3, %s4, %s5
  %s7 = sld [smem:[#allocation0]]
  $region65: #{conv_mlp_withtime.2} parent=0
    _
  %s9 = ssub.s32 1, %s7
  %s10 = scalar_select 0, %s9, %s7
  loop: start=0, step=1, limit=4
  $region2: #{conv_mlp_withtime.2} parent=0 // loop_pre_header
    _
  $region3: #{conv_mlp_withtime.2} parent=0 // loop_header
    %s12 = sphi 0, %s16
    %p13 = scmp.ge.s32.totalorder %s12, 4
    %s19 = sphi 0, %s31
    %s20 = sphi 0, %s27
    %s21 = sphi 0, %s19
    %s22 = sphi 0, %s20
    %s23 = sphi 0, %s21
    %s24 = sphi 0, %s22
    %s36 = sphi 0, %s38
    %s39 = sphi 0, %s36
    %s40 = sphi 0, %s39
    %s56 = sphi 0, %s40
    %s60 = sphi 0, %s60
    %s62 = sphi 0, %s60
    %s63 = sphi 0, %s62
    %s77 = sphi 0, %s63
    %s81 = sphi 0, %s81
    %s83 = sphi 0, %s81
    %s84 = sphi 0, %s83
    %s98 = sphi 0, %s84
    %s106 = sphi 0, %s108
    %s109 = sphi 0, %s106
    %s110 = sphi 0, %s109
    %s126 = sphi 0, %s110
    %s132 = sphi 0, %s134
    %s135 = sphi 0, %s132
    %s136 = sphi 0, %s135
    %s152 = sphi 0, %s136
    %s158 = sphi 0, %s160
    %s161 = sphi 0, %s158
    %s162 = sphi 0, %s161
    %s178 = sphi 0, %s162
  $region4: #{conv_mlp_withtime.2} parent=0 // loop_header_branch
    %15 = sbr.rel (%p13) target = $region8
  $region5: #{conv_mlp_withtime.2} parent=0 // loop_body
    %s17 = ssub.s32 %s12, 1
    %s18 = ssub.s32 %s12, 2
    %s25 = sadd.s32 1, %s20
    %p26 = scmp.ge.s32.totalorder %s25, 1
    %s27 = scalar_select %p26, 0, %s25
    %s28 = sadd.s32 1, %s19
    %s29 = scalar_select %p26, %s28, %s19
    %p30 = scmp.ge.s32.totalorder %s29, 2
    %s31 = scalar_select %p30, 0, %s29
    %s32 = ssub.s32 %s19, %s31
    %s33 = ssub.s32 %s20, %s27
    %s34 = sor.u32 %s32, %s33
    %p35 = scmp.eq.s32.totalorder %s34, 0
    %s37 = sadd.s32 %s36, 1
    %s38 = scalar_select %p35, %s36, %s37
    %p41 = pneg %p35
    %p42 = scmp.eq.s32.totalorder %s12, 1
    %p43 = por %p41, %p42
    %p44 = scmp.ne.s32.totalorder %s36, %s39
    %p45 = scmp.eq.s32.totalorder %s12, 0
    %p46 = por %p44, %p45
    %p47 = scmp.ne.s32.totalorder %s36, %s39
    %p48 = scmp.eq.s32.totalorder %s17, 1
    %p49 = por %p47, %p48
    %p50 = scmp.ne.s32.totalorder %s39, %s40
    %p51 = scmp.eq.s32.totalorder %s17, 0
    %p52 = por %p50, %p51
    %p53 = scmp.ne.s32.totalorder %s39, %s40
    %p54 = scmp.eq.s32.totalorder %s18, 1
    %p55 = por %p53, %p54
    %p57 = scmp.ne.s32.totalorder %s40, %s56
    %p58 = scmp.eq.s32.totalorder %s18, 0
    %p59 = por %p57, %p58
    %s61 = sadd.s32 %s60, 1
    %p64 = scmp.eq.s32.totalorder %s12, 1
    %p65 = scmp.ne.s32.totalorder %s60, %s62
    %p66 = scmp.eq.s32.totalorder %s12, 0
    %p67 = por %p65, %p66
    %p68 = scmp.ne.s32.totalorder %s60, %s62
    %p69 = scmp.eq.s32.totalorder %s17, 1
    %p70 = por %p68, %p69
    %p71 = scmp.ne.s32.totalorder %s62, %s63
    %p72 = scmp.eq.s32.totalorder %s17, 0
    %p73 = por %p71, %p72
    %p74 = scmp.ne.s32.totalorder %s62, %s63
    %p75 = scmp.eq.s32.totalorder %s18, 1
    %p76 = por %p74, %p75
    %p78 = scmp.ne.s32.totalorder %s63, %s77
    %p79 = scmp.eq.s32.totalorder %s18, 0
    %p80 = por %p78, %p79
    %s82 = sadd.s32 %s81, 1
    %p85 = scmp.eq.s32.totalorder %s12, 1
    %p86 = scmp.ne.s32.totalorder %s81, %s83
    %p87 = scmp.eq.s32.totalorder %s12, 0
    %p88 = por %p86, %p87
    %p89 = scmp.ne.s32.totalorder %s81, %s83
    %p90 = scmp.eq.s32.totalorder %s17, 1
    %p91 = por %p89, %p90
    %p92 = scmp.ne.s32.totalorder %s83, %s84
    %p93 = scmp.eq.s32.totalorder %s17, 0
    %p94 = por %p92, %p93
    %p95 = scmp.ne.s32.totalorder %s83, %s84
    %p96 = scmp.eq.s32.totalorder %s18, 1
    %p97 = por %p95, %p96
    %p99 = scmp.ne.s32.totalorder %s84, %s98
    %p100 = scmp.eq.s32.totalorder %s18, 0
    %p101 = por %p99, %p100
    %s102 = ssub.s32 %s19, %s31
    %s103 = ssub.s32 %s20, %s27
    %s104 = sor.u32 %s102, %s103
    %p105 = scmp.eq.s32.totalorder %s104, 0
    %s107 = sadd.s32 %s106, 1
    %s108 = scalar_select %p105, %s106, %s107
    %p111 = pneg %p105
    %p112 = scmp.eq.s32.totalorder %s12, 1
    %p113 = por %p111, %p112
    %p114 = scmp.ne.s32.totalorder %s106, %s109
    %p115 = scmp.eq.s32.totalorder %s12, 0
    %p116 = por %p114, %p115
    %p117 = scmp.ne.s32.totalorder %s106, %s109
    %p118 = scmp.eq.s32.totalorder %s17, 1
    %p119 = por %p117, %p118
    %p120 = scmp.ne.s32.totalorder %s109, %s110
    %p121 = scmp.eq.s32.totalorder %s17, 0
    %p122 = por %p120, %p121
    %p123 = scmp.ne.s32.totalorder %s109, %s110
    %p124 = scmp.eq.s32.totalorder %s18, 1
    %p125 = por %p123, %p124
    %p127 = scmp.ne.s32.totalorder %s110, %s126
    %p128 = scmp.eq.s32.totalorder %s18, 0
    %p129 = por %p127, %p128
    %s130 = ssub.s32 %s19, %s31
    %p131 = scmp.eq.s32.totalorder %s130, 0
    %s133 = sadd.s32 %s132, 1
    %s134 = scalar_select %p131, %s132, %s133
    %p137 = pneg %p131
    %p138 = scmp.eq.s32.totalorder %s12, 1
    %p139 = por %p137, %p138
    %p140 = scmp.ne.s32.totalorder %s132, %s135
    %p141 = scmp.eq.s32.totalorder %s12, 0
    %p142 = por %p140, %p141
    %p143 = scmp.ne.s32.totalorder %s132, %s135
    %p144 = scmp.eq.s32.totalorder %s17, 1
    %p145 = por %p143, %p144
    %p146 = scmp.ne.s32.totalorder %s135, %s136
    %p147 = scmp.eq.s32.totalorder %s17, 0
    %p148 = por %p146, %p147
    %p149 = scmp.ne.s32.totalorder %s135, %s136
    %p150 = scmp.eq.s32.totalorder %s18, 1
    %p151 = por %p149, %p150
    %p153 = scmp.ne.s32.totalorder %s136, %s152
    %p154 = scmp.eq.s32.totalorder %s18, 0
    %p155 = por %p153, %p154
    %s156 = ssub.s32 %s19, %s31
    %p157 = scmp.eq.s32.totalorder %s156, 0
    %s159 = sadd.s32 %s158, 1
    %s160 = scalar_select %p157, %s158, %s159
    %p163 = pneg %p157
    %p164 = scmp.eq.s32.totalorder %s12, 1
    %p165 = por %p163, %p164
    %p166 = scmp.ne.s32.totalorder %s158, %s161
    %p167 = scmp.eq.s32.totalorder %s12, 0
    %p168 = por %p166, %p167
    %p169 = scmp.ne.s32.totalorder %s158, %s161
    %p170 = scmp.eq.s32.totalorder %s17, 1
    %p171 = por %p169, %p170
    %p172 = scmp.ne.s32.totalorder %s161, %s162
    %p173 = scmp.eq.s32.totalorder %s17, 0
    %p174 = por %p172, %p173
    %p175 = scmp.ne.s32.totalorder %s161, %s162
    %p176 = scmp.eq.s32.totalorder %s18, 1
    %p177 = por %p175, %p176
    %p179 = scmp.ne.s32.totalorder %s162, %s178
    %p180 = scmp.eq.s32.totalorder %s18, 0
    %p181 = por %p179, %p180
    %p182 = scmp.le.s32.totalorder 1, %s12
    %p183 = scmp.lt.s32.totalorder %s12, 3
    %p184 = pnand %p182, %p183
    %p185 = pneg %p184
    // Predicated region
    $region9: #{conv_mlp_withtime.2} parent=5 // pred_check
      _
    $region10: #{conv_mlp_withtime.2} parent=5 // pred_check_branch
      %187 = sbr.rel (%p184) target = $region12
    $region11: #{conv_mlp_withtime.2} parent=5 // pred_region
      %s188 = ssub.s32 %s12, 1
      // Predicated region
      $region13: #{conv_mlp_withtime.2} parent=11 // pred_check
        %p189 = pneg %p73
      $region14: #{conv_mlp_withtime.2} parent=11 // pred_check_branch
        %191 = sbr.rel (%p189) target = $region16
      $region15: #{conv_mlp_withtime.2} parent=11 // pred_region
        _
      $region16: #{conv_mlp_withtime.2} parent=11 // pred_fallthru
        _
      // Predicated region
      $region17: #{conv_mlp_withtime.2} parent=11 // pred_check
        %p192 = pneg %p94
      $region18: #{conv_mlp_withtime.2} parent=11 // pred_check_branch
        %194 = sbr.rel (%p192) target = $region20
      $region19: #{conv_mlp_withtime.2} parent=11 // pred_region
        _
      $region20: #{conv_mlp_withtime.2} parent=11 // pred_fallthru
        _
    $region12: #{conv_mlp_withtime.2} parent=5 // pred_fallthru
      _
    %p195 = scmp.lt.s32.totalorder %s12, 2
    // Predicated region
    $region21: #{conv_mlp_withtime.2} parent=5 // pred_check
      %p196 = pneg %p195
    $region22: #{conv_mlp_withtime.2} parent=5 // pred_check_branch
      %198 = sbr.rel (%p196) target = $region24
    $region23: #{conv_mlp_withtime.2} parent=5 // pred_region
      // Predicated region
      $region25: #{conv_mlp_withtime.2} parent=23 // pred_check
        %p199 = pneg %p46
      $region26: #{conv_mlp_withtime.2} parent=23 // pred_check_branch
        %201 = sbr.rel (%p199) target = $region28
      $region27: #{conv_mlp_withtime.2} parent=23 // pred_region
        %s202 = smul.u32 2, %s20
        %p203 = scmp.lt.s32.totalorder %s19, 1
        %s204 = scalar_select %p203, %s19, 1
        %p205 = scmp.lt.s32.totalorder %s202, 1
        %s206 = scalar_select %p205, %s202, 1
        %s207 = smul.addr %s204, 10
        %s208 = sadd.s32 %s206, %s207
        %s209 = smul.addr %s208, 8
        %s210 = scalar_lea.vmem %s0, %s209
        %s211 = smul.u32 2, %s20
      $region28: #{conv_mlp_withtime.2} parent=23 // pred_fallthru
        _
    $region24: #{conv_mlp_withtime.2} parent=5 // pred_fallthru
      _
    %p212 = scmp.le.s32.totalorder 1, %s12
    %p213 = scmp.lt.s32.totalorder %s12, 3
    %p214 = pnand %p212, %p213
    %p215 = pneg %p214
    // Predicated region
    $region29: #{conv_mlp_withtime.2} parent=5 // pred_check
      _
    $region30: #{conv_mlp_withtime.2} parent=5 // pred_check_branch
      %217 = sbr.rel (%p214) target = $region32
    $region31: #{conv_mlp_withtime.2} parent=5 // pred_region
      %s218 = ssub.s32 %s12, 1
      %s219 = smul.u32 2, %s22
      %p220 = scmp.lt.s32.totalorder %s21, 1
      %s221 = scalar_select %p220, %s21, 1
      %p222 = scmp.lt.s32.totalorder %s219, 1
      %s223 = scalar_select %p222, %s219, 1
      %s224 = smul.addr %s221, 10
      %s225 = sadd.s32 %s223, %s224
      %s226 = smul.addr %s225, 8
      %s227 = scalar_lea.vmem %s0, %s226
      %p228 = pneg %p52
      %p229 = pneg %p49
      %p230 = pneg %p73
      %p231 = pneg %p70
      %p232 = pneg %p94
      %p233 = pneg %p91
      %p234 = pneg %p122
      %p235 = pneg %p119
      %s236 = smul.u32 2, %s22
      %p237 = scmp.lt.s32.totalorder %s21, 1
      %s238 = scalar_select %p237, %s21, 1
      %p239 = scmp.lt.s32.totalorder %s236, 1
      %s240 = scalar_select %p239, %s236, 1
      %s241 = smul.addr %s238, 2
      %s242 = sadd.s32 %s240, %s241
      %s243 = smul.addr %s242, 4
      %s244 = scalar_lea.vmem %s3, %s243
      %p245 = pneg %p148
      %p246 = pneg %p145
      %p247 = scmp.lt.s32.totalorder %s21, 1
      %s248 = scalar_select %p247, %s21, 1
      %s249 = smul.addr %s248, 4
      %s250 = scalar_lea.vmem %s4, %s249
      %p251 = pneg %p174
      %p252 = pneg %p171
      %p253 = scmp.lt.s32.totalorder %s21, 1
      %s254 = scalar_select %p253, %s21, 1
      %s255 = smul.addr %s254, 4
      %s256 = scalar_lea.vmem %s5, %s255
      %s257 = smul.u32 2, %s22
      %p258 = scmp.lt.s32.totalorder %s21, 1
      %s259 = scalar_select %p258, %s21, 1
      %p260 = scmp.lt.s32.totalorder %s257, 1
      %s261 = scalar_select %p260, %s257, 1
      %s262 = smul.addr %s259, 10
      %s263 = sadd.s32 %s261, %s262
      %s264 = smul.addr %s263, 8
      %s265 = scalar_lea.vmem %s0, %s264
      %s266 = smul.u32 2, %s22
      %s267 = smul.u32 2, %s22
      %p268 = scmp.lt.s32.totalorder %s21, 1
      %s269 = scalar_select %p268, %s21, 1
      %p270 = scmp.lt.s32.totalorder %s267, 1
      %s271 = scalar_select %p270, %s267, 1
      %s272 = smul.addr %s269, 2
      %s273 = sadd.s32 %s271, %s272
      %s274 = smul.addr %s273, 4
      %s275 = scalar_lea.vmem %s3, %s274
      %s276 = smul.u32 2, %s22
      %p277 = scmp.lt.s32.totalorder %s21, 1
      %s278 = scalar_select %p277, %s21, 1
      %s279 = smul.addr %s278, 4
      %s280 = scalar_lea.vmem %s4, %s279
      %p281 = scmp.lt.s32.totalorder %s21, 1
      %s282 = scalar_select %p281, %s21, 1
      %s283 = smul.addr %s282, 4
      %s284 = scalar_lea.vmem %s5, %s283
      %v285 = vld [vmem:[%s1] sm:$0xf]
      %v286 = vld [vmem:[%s265] sm:$0xff]
      %v287 = vld [vmem:[%s265 + $0x8] sm:$0xff]
      %v288 = vld [vmem:[%s265 + $0x10] sm:$0xff]
      %v289 = vld [vmem:[%s265 + $0x18] sm:$0xff]
      %v290 = vld [vmem:[%s265 + $0x20] sm:$0xff]
      %v291 = vld [vmem:[%s265 + $0x28] sm:$0xff]
      %v292 = vld [vmem:[%s265 + $0x30] sm:$0xff]
      %v293 = vld [vmem:[%s265 + $0x38] sm:$0xff]
      %v294 = vld [vmem:[%s265 + $0x40] sm:$0xf]
      %v295 = vld [vmem:[%s265 + $0x48] sm:$0xf]
      %v296 = vld [vmem:[%s2] sm:$0xf]
      %298 = vset.pattern.permute.xlu0 0
      %299 = vperm.xlu0 %298, %v296
      %v300 = vpop.permute.xlu0 %299
      %vm302 = vcmask 293888
      %v304 = vsel %vm302, %v285, 0
      %vm306 = vcmask 1043456
      %v308 = vsel %vm306, %v294, 0
      %v311 = vsel %vm306, %v295, 0
      %313 = vmatprep.subr.mxu0 0.0
      %314 = vmatpush1.msra.mxu0 0.0
      %315 = vmatprep.subr.mxu0 0.0
      %316 = vmatpush1.msra.mxu0 0.0
      %317 = vmatprep.subr.mxu0 0.0
      %318 = vmatpush1.msra.mxu0 0.0
      %319 = vmatprep.subr.mxu0 0.0
      %320 = vmatpush1.msra.mxu0 0.0
      %321 = vmatprep.subr.mxu0 0.0
      %322 = vmatpush1.msra.mxu0 0.0
      %323 = vmatprep.subr.mxu0 0.0
      %324 = vmatpush1.msra.mxu0 0.0
      %325 = vmatprep.subr.mxu0 0.0
      %326 = vmatpush1.msra.mxu0 0.0
      %327 = vmatprep.subr.mxu0 0.0
      %328 = vmatpush1.msra.mxu0 0.0
      %329 = vmatprep.subr.mxu0 0.0
      %330 = vmatpush1.msra.mxu0 0.0
      %331 = vmatprep.subr.mxu0 0.0
      %332 = vmatpush1.msra.mxu0 0.0
      %333 = vmatprep.subr.mxu0 0.0
      %334 = vmatpush1.msra.mxu0 0.0
      %335 = vmatprep.subr.mxu0 %v311
      %336 = vmatpush1.msra.mxu0 %v308
      %337 = vmatprep.subr.mxu0 %v293
      %338 = vmatpush1.msra.mxu0 %v292
      %339 = vmatprep.subr.mxu0 %v291
      %340 = vmatpush1.msra.mxu0 %v290
      %341 = vmatprep.subr.mxu0 %v289
      %342 = vmatpush1.msra.mxu0 %v288
      %343 = vmatprep.subr.mxu0 %v287
      %344 = vmatpush1.msra.mxu0 %v286
      %345 = vmatprep.subr.mxu0 0.0
      %346 = vmatpush2.msra.mxu0 0.0
      %347 = vmatprep.subr.mxu0 0.0
      %348 = vmatpush2.msra.mxu0 0.0
      %349 = vmatprep.subr.mxu0 0.0
      %350 = vmatpush2.msra.mxu0 0.0
      %351 = vmatprep.subr.mxu0 0.0
      %352 = vmatpush2.msra.mxu0 0.0
      %353 = vmatprep.subr.mxu0 0.0
      %354 = vmatpush2.msra.mxu0 0.0
      %355 = vmatprep.subr.mxu0 0.0
      %356 = vmatpush2.msra.mxu0 0.0
      %357 = vmatprep.subr.mxu0 0.0
      %358 = vmatpush2.msra.mxu0 0.0
      %359 = vmatprep.subr.mxu0 0.0
      %360 = vmatpush2.msra.mxu0 0.0
      %361 = vmatprep.subr.mxu0 0.0
      %362 = vmatpush2.msra.mxu0 0.0
      %363 = vmatprep.subr.mxu0 0.0
      %364 = vmatpush2.msra.mxu0 0.0
      %365 = vmatprep.subr.mxu0 0.0
      %366 = vmatpush2.msra.mxu0 0.0
      %367 = vmatprep.subr.mxu0 0.0
      %368 = vmatpush2.msra.mxu0 0.0
      %369 = vmatprep.subr.mxu0 0.0
      %370 = vmatpush2.msra.mxu0 0.0
      %371 = vmatprep.subr.mxu0 0.0
      %372 = vmatpush2.msra.mxu0 0.0
      %373 = vmatprep.subr.mxu0 0.0
      %374 = vmatpush2.msra.mxu0 0.0
      %375 = vmatprep.subr.mxu0 0.0
      %376 = vmatpush2.msra.mxu0 0.0
      %377 = vmatprep.mubr.f32.mxu0 0.0
      %378 = vmatmul.mubr.f32.gmra.mxu0 %v304
      %v379 = vpop.f32.mrf.mxu0
      %v380 = vadd.f32 %v300, %v379
      %v381 = vpop.f32.mrf.mxu0
      %v382 = vadd.f32 %v300, %v381
      %383 = vdwg.mxu0
      %v386 = vcombine.low %v380, %v382
      %388 = vst [vmem:[%s275] sm:$0xff] %v386
      %p389 = scmp.eq.s32.totalorder %s22, 0
      // Predicated region
      $region33: #{conv_mlp_withtime.2} parent=31 // pred_check
        %p390 = pneg %p389
      $region34: #{conv_mlp_withtime.2} parent=31 // pred_check_branch
        %392 = sbr.rel (%p390) target = $region36
      $region35: #{conv_mlp_withtime.2} parent=31 // pred_region
        %vm393 = vcmask 3072
        %394 = vst.msk [vmem:[%s280] sm:$0xf] %vm393, 0.0
        %395 = vst.msk [vmem:[%s284] sm:$0xf] %vm393, 0.0
      $region36: #{conv_mlp_withtime.2} parent=31 // pred_fallthru
        _
      %v396 = vld [vmem:[%s280] sm:$0xf]
      %v397 = vsel %vm306, %v380, 0.0
      %v398 = vsel %vm306, %v382, 0.0
      %v399 = vadd.f32 %v397, %v398
      %400 = vadd.xlane.f32.xlu0 %v399
      %v401 = vpop.xlane.xlu0 %400
      %v402 = vadd.f32 %v396, %v401
      %vm403 = vcmask 3072
      %404 = vst.msk [vmem:[%s280] sm:$0xf] %vm403, %v402
      %v405 = vld [vmem:[%s284] sm:$0xf]
      %v406 = vmul.f32 %v380, %v380
      %v407 = vmul.f32 %v382, %v382
      %v408 = vsel %vm306, %v406, 0.0
      %v409 = vsel %vm306, %v407, 0.0
      %v410 = vadd.f32 %v408, %v409
      %411 = vadd.xlane.f32.xlu0 %v410
      %v412 = vpop.xlane.xlu0 %411
      %v413 = vadd.f32 %v405, %v412
      %414 = vst.msk [vmem:[%s284] sm:$0xf] %vm403, %v413
      %s415 = smul.u32 2, %s22
      %p416 = scmp.lt.s32.totalorder %s21, 1
      %s417 = scalar_select %p416, %s21, 1
      %p418 = scmp.lt.s32.totalorder %s415, 1
      %s419 = scalar_select %p418, %s415, 1
      %s420 = smul.addr %s417, 2
      %s421 = sadd.s32 %s419, %s420
      %s422 = smul.addr %s421, 4
      %s423 = scalar_lea.vmem %s3, %s422
      %p424 = scmp.lt.s32.totalorder %s21, 1
      %s425 = scalar_select %p424, %s21, 1
      %s426 = smul.addr %s425, 4
      %s427 = scalar_lea.vmem %s4, %s426
      %p428 = scmp.lt.s32.totalorder %s21, 1
      %s429 = scalar_select %p428, %s21, 1
      %s430 = smul.addr %s429, 4
      %s431 = scalar_lea.vmem %s5, %s430
      // Predicated region
      $region37: #{conv_mlp_withtime.2} parent=31 // pred_check
        %p432 = pneg %p119
      $region38: #{conv_mlp_withtime.2} parent=31 // pred_check_branch
        %434 = sbr.rel (%p432) target = $region40
      $region39: #{conv_mlp_withtime.2} parent=31 // pred_region
        %s435 = smul.u32 2, %s22
      $region40: #{conv_mlp_withtime.2} parent=31 // pred_fallthru
        _
      // Predicated region
      $region41: #{conv_mlp_withtime.2} parent=31 // pred_check
        %p436 = pneg %p145
      $region42: #{conv_mlp_withtime.2} parent=31 // pred_check_branch
        %438 = sbr.rel (%p436) target = $region44
      $region43: #{conv_mlp_withtime.2} parent=31 // pred_region
        _
      $region44: #{conv_mlp_withtime.2} parent=31 // pred_fallthru
        _
      // Predicated region
      $region45: #{conv_mlp_withtime.2} parent=31 // pred_check
        %p439 = pneg %p171
      $region46: #{conv_mlp_withtime.2} parent=31 // pred_check_branch
        %441 = sbr.rel (%p439) target = $region48
      $region47: #{conv_mlp_withtime.2} parent=31 // pred_region
        _
      $region48: #{conv_mlp_withtime.2} parent=31 // pred_fallthru
        _
    $region32: #{conv_mlp_withtime.2} parent=5 // pred_fallthru
      _
    %p442 = scmp.le.s32.totalorder 2, %s12
    // Predicated region
    $region49: #{conv_mlp_withtime.2} parent=5 // pred_check
      %p443 = pneg %p442
    $region50: #{conv_mlp_withtime.2} parent=5 // pred_check_branch
      %445 = sbr.rel (%p443) target = $region52
    $region51: #{conv_mlp_withtime.2} parent=5 // pred_region
      %s446 = ssub.s32 %s12, 2
      // Predicated region
      $region53: #{conv_mlp_withtime.2} parent=51 // pred_check
        %p447 = pneg %p125
      $region54: #{conv_mlp_withtime.2} parent=51 // pred_check_branch
        %449 = sbr.rel (%p447) target = $region56
      $region55: #{conv_mlp_withtime.2} parent=51 // pred_region
        %s450 = smul.u32 2, %s24
        %p451 = scmp.lt.s32.totalorder %s23, 1
        %s452 = scalar_select %p451, %s23, 1
        %p453 = scmp.lt.s32.totalorder %s450, 1
        %s454 = scalar_select %p453, %s450, 1
        %s455 = smul.addr %s452, 2
        %s456 = sadd.s32 %s454, %s455
        %s457 = smul.addr %s456, 4
        %s458 = scalar_lea.vmem %s3, %s457
      $region56: #{conv_mlp_withtime.2} parent=51 // pred_fallthru
        _
      // Predicated region
      $region57: #{conv_mlp_withtime.2} parent=51 // pred_check
        %p459 = pneg %p151
      $region58: #{conv_mlp_withtime.2} parent=51 // pred_check_branch
        %461 = sbr.rel (%p459) target = $region60
      $region59: #{conv_mlp_withtime.2} parent=51 // pred_region
        %p462 = scmp.lt.s32.totalorder %s23, 1
        %s463 = scalar_select %p462, %s23, 1
        %s464 = smul.addr %s463, 4
        %s465 = scalar_lea.vmem %s4, %s464
      $region60: #{conv_mlp_withtime.2} parent=51 // pred_fallthru
        _
      // Predicated region
      $region61: #{conv_mlp_withtime.2} parent=51 // pred_check
        %p466 = pneg %p177
      $region62: #{conv_mlp_withtime.2} parent=51 // pred_check_branch
        %468 = sbr.rel (%p466) target = $region64
      $region63: #{conv_mlp_withtime.2} parent=51 // pred_region
        %p469 = scmp.lt.s32.totalorder %s23, 1
        %s470 = scalar_select %p469, %s23, 1
        %s471 = smul.addr %s470, 4
        %s472 = scalar_lea.vmem %s5, %s471
      $region64: #{conv_mlp_withtime.2} parent=51 // pred_fallthru
        _
    $region52: #{conv_mlp_withtime.2} parent=5 // pred_fallthru
      _
  $region6: #{conv_mlp_withtime.2} parent=0 // loop_footer
    %s16 = sadd.s32 1, %s12
  $region7: #{conv_mlp_withtime.2} parent=0 // loop_footer_branch
    %11 = sbr.rel target = $region3
  $region8: #{conv_mlp_withtime.2} parent=0 // loop_exit
    _

// kernel: conv_mlp_withtime.3
$region0: #{conv_mlp_withtime.3}
  #allocation0 [shape = 'u32[]', space=smem, size = 0x4, offset = 0x4, fixed_abs, tag = 'smem constant byte address 0x4 - core index']
  #allocation1 [shape = 'u32[144,128]{1,0:T(1,128)}', space=vmem, size = 0x12000, scoped, tag = 'internal scratch']
  %s0 = inlined_call_operand.vmem [shape: f32[2,4,256], index: 0, kind: input, shape index: {}]
  %s1 = inlined_call_operand.vmem [shape: f32[2,4,1], index: 1, kind: input, shape index: {}]
  %s2 = inlined_call_operand.vmem [shape: f32[2,4,1], index: 2, kind: input, shape index: {}]
  %s3 = inlined_call_operand.vmem [shape: f32[4,4], index: 3, kind: input, shape index: {}]
  %s4 = inlined_call_operand.vmem [shape: f32[4,1], index: 4, kind: input, shape index: {}]
  %s5 = inlined_call_operand.vmem [shape: f32[2,4,256], index: 5, kind: output, shape index: {}]
  %s6 = sld [smem:[#allocation0]]
  $region53: #{conv_mlp_withtime.3} parent=0
    _
  %s8 = ssub.s32 1, %s6
  %s9 = scalar_select 0, %s8, %s6
  loop: start=0, step=1, limit=4
  $region2: #{conv_mlp_withtime.3} parent=0 // loop_pre_header
    _
  $region3: #{conv_mlp_withtime.3} parent=0 // loop_header
    %s11 = sphi 0, %s15
    %p12 = scmp.ge.s32.totalorder %s11, 4
    %s18 = sphi 0, %s30
    %s19 = sphi 0, %s26
    %s20 = sphi 0, %s18
    %s21 = sphi 0, %s19
    %s22 = sphi 0, %s20
    %s23 = sphi 0, %s21
    %s35 = sphi 0, %s37
    %s38 = sphi 0, %s35
    %s39 = sphi 0, %s38
    %s55 = sphi 0, %s39
    %s61 = sphi 0, %s63
    %s64 = sphi 0, %s61
    %s65 = sphi 0, %s64
    %s81 = sphi 0, %s65
    %s87 = sphi 0, %s89
    %s90 = sphi 0, %s87
    %s91 = sphi 0, %s90
    %s107 = sphi 0, %s91
    %s111 = sphi 0, %s111
    %s113 = sphi 0, %s111
    %s114 = sphi 0, %s113
    %s128 = sphi 0, %s114
    %s132 = sphi 0, %s132
    %s134 = sphi 0, %s132
    %s135 = sphi 0, %s134
    %s149 = sphi 0, %s135
    %s157 = sphi 0, %s159
    %s160 = sphi 0, %s157
    %s161 = sphi 0, %s160
    %s177 = sphi 0, %s161
  $region4: #{conv_mlp_withtime.3} parent=0 // loop_header_branch
    %14 = sbr.rel (%p12) target = $region8
  $region5: #{conv_mlp_withtime.3} parent=0 // loop_body
    %s16 = ssub.s32 %s11, 1
    %s17 = ssub.s32 %s11, 2
    %s24 = sadd.s32 1, %s19
    %p25 = scmp.ge.s32.totalorder %s24, 1
    %s26 = scalar_select %p25, 0, %s24
    %s27 = sadd.s32 1, %s18
    %s28 = scalar_select %p25, %s27, %s18
    %p29 = scmp.ge.s32.totalorder %s28, 2
    %s30 = scalar_select %p29, 0, %s28
    %s31 = ssub.s32 %s18, %s30
    %s32 = ssub.s32 %s19, %s26
    %s33 = sor.u32 %s31, %s32
    %p34 = scmp.eq.s32.totalorder %s33, 0
    %s36 = sadd.s32 %s35, 1
    %s37 = scalar_select %p34, %s35, %s36
    %p40 = pneg %p34
    %p41 = scmp.eq.s32.totalorder %s11, 1
    %p42 = por %p40, %p41
    %p43 = scmp.ne.s32.totalorder %s35, %s38
    %p44 = scmp.eq.s32.totalorder %s11, 0
    %p45 = por %p43, %p44
    %p46 = scmp.ne.s32.totalorder %s35, %s38
    %p47 = scmp.eq.s32.totalorder %s16, 1
    %p48 = por %p46, %p47
    %p49 = scmp.ne.s32.totalorder %s38, %s39
    %p50 = scmp.eq.s32.totalorder %s16, 0
    %p51 = por %p49, %p50
    %p52 = scmp.ne.s32.totalorder %s38, %s39
    %p53 = scmp.eq.s32.totalorder %s17, 1
    %p54 = por %p52, %p53
    %p56 = scmp.ne.s32.totalorder %s39, %s55
    %p57 = scmp.eq.s32.totalorder %s17, 0
    %p58 = por %p56, %p57
    %s59 = ssub.s32 %s18, %s30
    %p60 = scmp.eq.s32.totalorder %s59, 0
    %s62 = sadd.s32 %s61, 1
    %s63 = scalar_select %p60, %s61, %s62
    %p66 = pneg %p60
    %p67 = scmp.eq.s32.totalorder %s11, 1
    %p68 = por %p66, %p67
    %p69 = scmp.ne.s32.totalorder %s61, %s64
    %p70 = scmp.eq.s32.totalorder %s11, 0
    %p71 = por %p69, %p70
    %p72 = scmp.ne.s32.totalorder %s61, %s64
    %p73 = scmp.eq.s32.totalorder %s16, 1
    %p74 = por %p72, %p73
    %p75 = scmp.ne.s32.totalorder %s64, %s65
    %p76 = scmp.eq.s32.totalorder %s16, 0
    %p77 = por %p75, %p76
    %p78 = scmp.ne.s32.totalorder %s64, %s65
    %p79 = scmp.eq.s32.totalorder %s17, 1
    %p80 = por %p78, %p79
    %p82 = scmp.ne.s32.totalorder %s65, %s81
    %p83 = scmp.eq.s32.totalorder %s17, 0
    %p84 = por %p82, %p83
    %s85 = ssub.s32 %s18, %s30
    %p86 = scmp.eq.s32.totalorder %s85, 0
    %s88 = sadd.s32 %s87, 1
    %s89 = scalar_select %p86, %s87, %s88
    %p92 = pneg %p86
    %p93 = scmp.eq.s32.totalorder %s11, 1
    %p94 = por %p92, %p93
    %p95 = scmp.ne.s32.totalorder %s87, %s90
    %p96 = scmp.eq.s32.totalorder %s11, 0
    %p97 = por %p95, %p96
    %p98 = scmp.ne.s32.totalorder %s87, %s90
    %p99 = scmp.eq.s32.totalorder %s16, 1
    %p100 = por %p98, %p99
    %p101 = scmp.ne.s32.totalorder %s90, %s91
    %p102 = scmp.eq.s32.totalorder %s16, 0
    %p103 = por %p101, %p102
    %p104 = scmp.ne.s32.totalorder %s90, %s91
    %p105 = scmp.eq.s32.totalorder %s17, 1
    %p106 = por %p104, %p105
    %p108 = scmp.ne.s32.totalorder %s91, %s107
    %p109 = scmp.eq.s32.totalorder %s17, 0
    %p110 = por %p108, %p109
    %s112 = sadd.s32 %s111, 1
    %p115 = scmp.eq.s32.totalorder %s11, 1
    %p116 = scmp.ne.s32.totalorder %s111, %s113
    %p117 = scmp.eq.s32.totalorder %s11, 0
    %p118 = por %p116, %p117
    %p119 = scmp.ne.s32.totalorder %s111, %s113
    %p120 = scmp.eq.s32.totalorder %s16, 1
    %p121 = por %p119, %p120
    %p122 = scmp.ne.s32.totalorder %s113, %s114
    %p123 = scmp.eq.s32.totalorder %s16, 0
    %p124 = por %p122, %p123
    %p125 = scmp.ne.s32.totalorder %s113, %s114
    %p126 = scmp.eq.s32.totalorder %s17, 1
    %p127 = por %p125, %p126
    %p129 = scmp.ne.s32.totalorder %s114, %s128
    %p130 = scmp.eq.s32.totalorder %s17, 0
    %p131 = por %p129, %p130
    %s133 = sadd.s32 %s132, 1
    %p136 = scmp.eq.s32.totalorder %s11, 1
    %p137 = scmp.ne.s32.totalorder %s132, %s134
    %p138 = scmp.eq.s32.totalorder %s11, 0
    %p139 = por %p137, %p138
    %p140 = scmp.ne.s32.totalorder %s132, %s134
    %p141 = scmp.eq.s32.totalorder %s16, 1
    %p142 = por %p140, %p141
    %p143 = scmp.ne.s32.totalorder %s134, %s135
    %p144 = scmp.eq.s32.totalorder %s16, 0
    %p145 = por %p143, %p144
    %p146 = scmp.ne.s32.totalorder %s134, %s135
    %p147 = scmp.eq.s32.totalorder %s17, 1
    %p148 = por %p146, %p147
    %p150 = scmp.ne.s32.totalorder %s135, %s149
    %p151 = scmp.eq.s32.totalorder %s17, 0
    %p152 = por %p150, %p151
    %s153 = ssub.s32 %s18, %s30
    %s154 = ssub.s32 %s19, %s26
    %s155 = sor.u32 %s153, %s154
    %p156 = scmp.eq.s32.totalorder %s155, 0
    %s158 = sadd.s32 %s157, 1
    %s159 = scalar_select %p156, %s157, %s158
    %p162 = pneg %p156
    %p163 = scmp.eq.s32.totalorder %s11, 1
    %p164 = por %p162, %p163
    %p165 = scmp.ne.s32.totalorder %s157, %s160
    %p166 = scmp.eq.s32.totalorder %s11, 0
    %p167 = por %p165, %p166
    %p168 = scmp.ne.s32.totalorder %s157, %s160
    %p169 = scmp.eq.s32.totalorder %s16, 1
    %p170 = por %p168, %p169
    %p171 = scmp.ne.s32.totalorder %s160, %s161
    %p172 = scmp.eq.s32.totalorder %s16, 0
    %p173 = por %p171, %p172
    %p174 = scmp.ne.s32.totalorder %s160, %s161
    %p175 = scmp.eq.s32.totalorder %s17, 1
    %p176 = por %p174, %p175
    %p178 = scmp.ne.s32.totalorder %s161, %s177
    %p179 = scmp.eq.s32.totalorder %s17, 0
    %p180 = por %p178, %p179
    %p181 = scmp.le.s32.totalorder 1, %s11
    %p182 = scmp.lt.s32.totalorder %s11, 3
    %p183 = pnand %p181, %p182
    %p184 = pneg %p183
    // Predicated region
    $region9: #{conv_mlp_withtime.3} parent=5 // pred_check
      _
    $region10: #{conv_mlp_withtime.3} parent=5 // pred_check_branch
      %186 = sbr.rel (%p183) target = $region12
    $region11: #{conv_mlp_withtime.3} parent=5 // pred_region
      %s187 = ssub.s32 %s11, 1
      // Predicated region
      $region13: #{conv_mlp_withtime.3} parent=11 // pred_check
        %p188 = pneg %p124
      $region14: #{conv_mlp_withtime.3} parent=11 // pred_check_branch
        %190 = sbr.rel (%p188) target = $region16
      $region15: #{conv_mlp_withtime.3} parent=11 // pred_region
        _
      $region16: #{conv_mlp_withtime.3} parent=11 // pred_fallthru
        _
      // Predicated region
      $region17: #{conv_mlp_withtime.3} parent=11 // pred_check
        %p191 = pneg %p145
      $region18: #{conv_mlp_withtime.3} parent=11 // pred_check_branch
        %193 = sbr.rel (%p191) target = $region20
      $region19: #{conv_mlp_withtime.3} parent=11 // pred_region
        _
      $region20: #{conv_mlp_withtime.3} parent=11 // pred_fallthru
        _
    $region12: #{conv_mlp_withtime.3} parent=5 // pred_fallthru
      _
    %p194 = scmp.lt.s32.totalorder %s11, 2
    // Predicated region
    $region21: #{conv_mlp_withtime.3} parent=5 // pred_check
      %p195 = pneg %p194
    $region22: #{conv_mlp_withtime.3} parent=5 // pred_check_branch
      %197 = sbr.rel (%p195) target = $region24
    $region23: #{conv_mlp_withtime.3} parent=5 // pred_region
      // Predicated region
      $region25: #{conv_mlp_withtime.3} parent=23 // pred_check
        %p198 = pneg %p45
      $region26: #{conv_mlp_withtime.3} parent=23 // pred_check_branch
        %200 = sbr.rel (%p198) target = $region28
      $region27: #{conv_mlp_withtime.3} parent=23 // pred_region
        %s201 = smul.u32 2, %s19
        %p202 = scmp.lt.s32.totalorder %s18, 1
        %s203 = scalar_select %p202, %s18, 1
        %p204 = scmp.lt.s32.totalorder %s201, 1
        %s205 = scalar_select %p204, %s201, 1
        %s206 = smul.addr %s203, 2
        %s207 = sadd.s32 %s205, %s206
        %s208 = smul.addr %s207, 4
        %s209 = scalar_lea.vmem %s0, %s208
        %s210 = smul.u32 2, %s19
      $region28: #{conv_mlp_withtime.3} parent=23 // pred_fallthru
        _
      // Predicated region
      $region29: #{conv_mlp_withtime.3} parent=23 // pred_check
        %p211 = pneg %p71
      $region30: #{conv_mlp_withtime.3} parent=23 // pred_check_branch
        %213 = sbr.rel (%p211) target = $region32
      $region31: #{conv_mlp_withtime.3} parent=23 // pred_region
        %p214 = scmp.lt.s32.totalorder %s18, 1
        %s215 = scalar_select %p214, %s18, 1
        %s216 = smul.addr %s215, 4
        %s217 = scalar_lea.vmem %s1, %s216
      $region32: #{conv_mlp_withtime.3} parent=23 // pred_fallthru
        _
      // Predicated region
      $region33: #{conv_mlp_withtime.3} parent=23 // pred_check
        %p218 = pneg %p97
      $region34: #{conv_mlp_withtime.3} parent=23 // pred_check_branch
        %220 = sbr.rel (%p218) target = $region36
      $region35: #{conv_mlp_withtime.3} parent=23 // pred_region
        %p221 = scmp.lt.s32.totalorder %s18, 1
        %s222 = scalar_select %p221, %s18, 1
        %s223 = smul.addr %s222, 4
        %s224 = scalar_lea.vmem %s2, %s223
      $region36: #{conv_mlp_withtime.3} parent=23 // pred_fallthru
        _
    $region24: #{conv_mlp_withtime.3} parent=5 // pred_fallthru
      _
    %p225 = scmp.le.s32.totalorder 1, %s11
    %p226 = scmp.lt.s32.totalorder %s11, 3
    %p227 = pnand %p225, %p226
    %p228 = pneg %p227
    // Predicated region
    $region37: #{conv_mlp_withtime.3} parent=5 // pred_check
      _
    $region38: #{conv_mlp_withtime.3} parent=5 // pred_check_branch
      %230 = sbr.rel (%p227) target = $region40
    $region39: #{conv_mlp_withtime.3} parent=5 // pred_region
      %s231 = ssub.s32 %s11, 1
      %s232 = smul.u32 2, %s21
      %p233 = scmp.lt.s32.totalorder %s20, 1
      %s234 = scalar_select %p233, %s20, 1
      %p235 = scmp.lt.s32.totalorder %s232, 1
      %s236 = scalar_select %p235, %s232, 1
      %s237 = smul.addr %s234, 2
      %s238 = sadd.s32 %s236, %s237
      %s239 = smul.addr %s238, 4
      %s240 = scalar_lea.vmem %s0, %s239
      %p241 = pneg %p51
      %p242 = pneg %p48
      %p243 = scmp.lt.s32.totalorder %s20, 1
      %s244 = scalar_select %p243, %s20, 1
      %s245 = smul.addr %s244, 4
      %s246 = scalar_lea.vmem %s1, %s245
      %p247 = pneg %p77
      %p248 = pneg %p74
      %p249 = scmp.lt.s32.totalorder %s20, 1
      %s250 = scalar_select %p249, %s20, 1
      %s251 = smul.addr %s250, 4
      %s252 = scalar_lea.vmem %s2, %s251
      %p253 = pneg %p103
      %p254 = pneg %p100
      %p255 = pneg %p124
      %p256 = pneg %p121
      %p257 = pneg %p145
      %p258 = pneg %p142
      %p259 = pneg %p173
      %p260 = pneg %p170
      %s261 = smul.u32 2, %s21
      %p262 = scmp.lt.s32.totalorder %s20, 1
      %s263 = scalar_select %p262, %s20, 1
      %p264 = scmp.lt.s32.totalorder %s261, 1
      %s265 = scalar_select %p264, %s261, 1
      %s266 = smul.addr %s263, 2
      %s267 = sadd.s32 %s265, %s266
      %s268 = smul.addr %s267, 4
      %s269 = scalar_lea.vmem %s5, %s268
      %s270 = smul.u32 2, %s21
      %p271 = scmp.lt.s32.totalorder %s20, 1
      %s272 = scalar_select %p271, %s20, 1
      %p273 = scmp.lt.s32.totalorder %s270, 1
      %s274 = scalar_select %p273, %s270, 1
      %s275 = smul.addr %s272, 2
      %s276 = sadd.s32 %s274, %s275
      %s277 = smul.addr %s276, 4
      %s278 = scalar_lea.vmem %s0, %s277
      %s279 = smul.u32 2, %s21
      %p280 = scmp.lt.s32.totalorder %s20, 1
      %s281 = scalar_select %p280, %s20, 1
      %s282 = smul.addr %s281, 4
      %s283 = scalar_lea.vmem %s1, %s282
      %p284 = scmp.lt.s32.totalorder %s20, 1
      %s285 = scalar_select %p284, %s20, 1
      %s286 = smul.addr %s285, 4
      %s287 = scalar_lea.vmem %s2, %s286
      %s288 = smul.u32 2, %s21
      %p289 = scmp.lt.s32.totalorder %s20, 1
      %s290 = scalar_select %p289, %s20, 1
      %p291 = scmp.lt.s32.totalorder %s288, 1
      %s292 = scalar_select %p291, %s288, 1
      %s293 = smul.addr %s290, 2
      %s294 = sadd.s32 %s292, %s293
      %s295 = smul.addr %s294, 4
      %s296 = scalar_lea.vmem %s5, %s295
      %s297 = smul.u32 2, %s21
      %v298 = vld [vmem:[%s278] sm:$0xff]
      %v299 = vld [vmem:[%s283] sm:$0xf]
      %301 = vset.pattern.permute.xlu0 0
      %302 = vperm.xlu0 %301, %v299
      %v303 = vpop.permute.xlu0 %302
      %v305 = vunpack.c.l.s4 839922192
      %v306 = vunpack.c.0.s8 %v305
      %v307 = vlaneseq
      %v308 = vshrl.u32 %v307, 7
      %v309 = vsub.s32 %v306, %v308
      %v310 = vrot.slane %v303, %v309
      %v312 = vmul.f32 %v298, %v310
      %v313 = vld [vmem:[%s287] sm:$0xf]
      %315 = vset.pattern.permute.xlu0 0
      %316 = vperm.xlu0 %315, %v313
      %v317 = vpop.permute.xlu0 %316
      %v319 = vunpack.c.l.s4 839922192
      %v320 = vunpack.c.0.s8 %v319
      %v321 = vlaneseq
      %v322 = vshrl.u32 %v321, 7
      %v323 = vsub.s32 %v320, %v322
      %v324 = vrot.slane %v317, %v323
      %v326 = vadd.f32 %v312, %v324
      %v327 = vmul.f32 %v326, 0.5
      %v328 = vmul.f32 %v326, 0.70710677
      %v329 = verf.f32.pop %v328
      %v330 = vadd.f32 %v329, 1.0
      %v331 = vmul.f32 %v327, %v330
      %v332 = vld [vmem:[%s3] sm:$0xf]
      %v333 = vld [vmem:[%s4] sm:$0xf]
      %335 = vset.pattern.permute.xlu0 0
      %336 = vperm.xlu0 %335, %v333
      %v337 = vpop.permute.xlu0 %336
      %v340 = vcombine.high %v331, %v331
      %vm341 = vcmask 31744
      %v343 = vsel %vm341, %v332, 0
      %vm345 = vcmask 1043456
      %v346 = vsel %vm345, %v331, 0
      %v348 = vsel %vm345, %v340, 0
      %350 = vmatprep.subr.mxu0 0.0
      %351 = vmatpush1.msra.mxu0 0.0
      %352 = vmatprep.subr.mxu0 0.0
      %353 = vmatpush1.msra.mxu0 0.0
      %354 = vmatprep.subr.mxu0 0.0
      %355 = vmatpush1.msra.mxu0 0.0
      %356 = vmatprep.subr.mxu0 0.0
      %357 = vmatpush1.msra.mxu0 0.0
      %358 = vmatprep.subr.mxu0 0.0
      %359 = vmatpush1.msra.mxu0 0.0
      %360 = vmatprep.subr.mxu0 0.0
      %361 = vmatpush1.msra.mxu0 0.0
      %362 = vmatprep.subr.mxu0 0.0
      %363 = vmatpush1.msra.mxu0 0.0
      %364 = vmatprep.subr.mxu0 0.0
      %365 = vmatpush1.msra.mxu0 0.0
      %366 = vmatprep.subr.mxu0 0.0
      %367 = vmatpush1.msra.mxu0 0.0
      %368 = vmatprep.subr.mxu0 0.0
      %369 = vmatpush1.msra.mxu0 0.0
      %370 = vmatprep.subr.mxu0 0.0
      %371 = vmatpush1.msra.mxu0 0.0
      %372 = vmatprep.subr.mxu0 0.0
      %373 = vmatpush1.msra.mxu0 0.0
      %374 = vmatprep.subr.mxu0 0.0
      %375 = vmatpush1.msra.mxu0 0.0
      %376 = vmatprep.subr.mxu0 0.0
      %377 = vmatpush1.msra.mxu0 0.0
      %378 = vmatprep.subr.mxu0 0.0
      %379 = vmatpush1.msra.mxu0 0.0
      %380 = vmatprep.subr.mxu0 %v348
      %381 = vmatpush1.msra.mxu0 %v346
      %382 = vmatprep.subr.mxu0 0.0
      %383 = vmatpush2.msra.mxu0 0.0
      %384 = vmatprep.subr.mxu0 0.0
      %385 = vmatpush2.msra.mxu0 0.0
      %386 = vmatprep.subr.mxu0 0.0
      %387 = vmatpush2.msra.mxu0 0.0
      %388 = vmatprep.subr.mxu0 0.0
      %389 = vmatpush2.msra.mxu0 0.0
      %390 = vmatprep.subr.mxu0 0.0
      %391 = vmatpush2.msra.mxu0 0.0
      %392 = vmatprep.subr.mxu0 0.0
      %393 = vmatpush2.msra.mxu0 0.0
      %394 = vmatprep.subr.mxu0 0.0
      %395 = vmatpush2.msra.mxu0 0.0
      %396 = vmatprep.subr.mxu0 0.0
      %397 = vmatpush2.msra.mxu0 0.0
      %398 = vmatprep.subr.mxu0 0.0
      %399 = vmatpush2.msra.mxu0 0.0
      %400 = vmatprep.subr.mxu0 0.0
      %401 = vmatpush2.msra.mxu0 0.0
      %402 = vmatprep.subr.mxu0 0.0
      %403 = vmatpush2.msra.mxu0 0.0
      %404 = vmatprep.subr.mxu0 0.0
      %405 = vmatpush2.msra.mxu0 0.0
      %406 = vmatprep.subr.mxu0 0.0
      %407 = vmatpush2.msra.mxu0 0.0
      %408 = vmatprep.subr.mxu0 0.0
      %409 = vmatpush2.msra.mxu0 0.0
      %410 = vmatprep.subr.mxu0 0.0
      %411 = vmatpush2.msra.mxu0 0.0
      %412 = vmatprep.subr.mxu0 0.0
      %413 = vmatpush2.msra.mxu0 0.0
      %414 = vmatprep.mubr.f32.mxu0 0.0
      %415 = vmatmul.mubr.f32.gmra.mxu0 %v343
      %v416 = vpop.f32.mrf.mxu0
      %v417 = vadd.f32 %v337, %v416
      %v418 = vpop.f32.mrf.mxu0
      %v419 = vadd.f32 %v337, %v418
      %420 = vdwg.mxu0
      %v423 = vcombine.low %v417, %v419
      %425 = vst [vmem:[%s296] sm:$0xff] %v423
      %s426 = smul.u32 2, %s21
      %p427 = scmp.lt.s32.totalorder %s20, 1
      %s428 = scalar_select %p427, %s20, 1
      %p429 = scmp.lt.s32.totalorder %s426, 1
      %s430 = scalar_select %p429, %s426, 1
      %s431 = smul.addr %s428, 2
      %s432 = sadd.s32 %s430, %s431
      %s433 = smul.addr %s432, 4
      %s434 = scalar_lea.vmem %s5, %s433
      // Predicated region
      $region41: #{conv_mlp_withtime.3} parent=39 // pred_check
        %p435 = pneg %p170
      $region42: #{conv_mlp_withtime.3} parent=39 // pred_check_branch
        %437 = sbr.rel (%p435) target = $region44
      $region43: #{conv_mlp_withtime.3} parent=39 // pred_region
        %s438 = smul.u32 2, %s21
      $region44: #{conv_mlp_withtime.3} parent=39 // pred_fallthru
        _
    $region40: #{conv_mlp_withtime.3} parent=5 // pred_fallthru
      _
    %p439 = scmp.le.s32.totalorder 2, %s11
    // Predicated region
    $region45: #{conv_mlp_withtime.3} parent=5 // pred_check
      %p440 = pneg %p439
    $region46: #{conv_mlp_withtime.3} parent=5 // pred_check_branch
      %442 = sbr.rel (%p440) target = $region48
    $region47: #{conv_mlp_withtime.3} parent=5 // pred_region
      %s443 = ssub.s32 %s11, 2
      // Predicated region
      $region49: #{conv_mlp_withtime.3} parent=47 // pred_check
        %p444 = pneg %p176
      $region50: #{conv_mlp_withtime.3} parent=47 // pred_check_branch
        %446 = sbr.rel (%p444) target = $region52
      $region51: #{conv_mlp_withtime.3} parent=47 // pred_region
        %s447 = smul.u32 2, %s23
        %p448 = scmp.lt.s32.totalorder %s22, 1
        %s449 = scalar_select %p448, %s22, 1
        %p450 = scmp.lt.s32.totalorder %s447, 1
        %s451 = scalar_select %p450, %s447, 1
        %s452 = smul.addr %s449, 2
        %s453 = sadd.s32 %s451, %s452
        %s454 = smul.addr %s453, 4
        %s455 = scalar_lea.vmem %s5, %s454
      $region52: #{conv_mlp_withtime.3} parent=47 // pred_fallthru
        _
    $region48: #{conv_mlp_withtime.3} parent=5 // pred_fallthru
      _
  $region6: #{conv_mlp_withtime.3} parent=0 // loop_footer
    %s15 = sadd.s32 1, %s11
  $region7: #{conv_mlp_withtime.3} parent=0 // loop_footer_branch
    %10 = sbr.rel target = $region3
  $region8: #{conv_mlp_withtime.3} parent=0 // loop_exit
    _

</llo_original>
